<compile_context>
chip_gen: v7x
topology: tpu7x:2x2x1
jax: 0.10.0
libtpu: 0.0.40
codegen_flags: <defaults>
</compile_context>

<pallas_src>
import jax
import jax.numpy as jnp
from jax import lax
from jax.experimental import pallas as pl
from jax.experimental.pallas import tpu as pltpu


def _round_up(n, m):
    return ((n + m - 1) // m) * m


def _pad_dim(a, axis, new_size):
    pad = new_size - a.shape[axis]
    if pad <= 0:
        return a
    widths = [(0, 0)] * a.ndim
    widths[axis] = (0, pad)
    return jnp.pad(a, widths)


def _tpu_tuning():
    """Generation-aware defaults: target-tile size and scoped-VMEM limit."""
    kind = ""
    try:
        kind = jax.devices()[0].device_kind.lower()
    except Exception:
        pass
    if "v7" in kind or "tpu7" in kind:
        # 64 MiB VMEM, 2 TensorCores: smaller tiles, leave VMEM headroom.
        return {"block_t": 128, "vmem_limit": 48 << 20, "two_cores": True}
    if "v5e" in kind or "v5 lite" in kind or "v5lite" in kind:
        # 4x128x128 MXU, 16 MiB default scoped VMEM -> raise it, tT=128.
        return {"block_t": 128, "vmem_limit": 100 << 20, "two_cores": False}
    # v6e and other 128 MiB-VMEM parts: 2x256x256 MXU, keep tT=256.
    return {"block_t": 256, "vmem_limit": 100 << 20, "two_cores": False}


def _make_kernel(has_key, has_mask, write_attn, scale, s_valid, mm_dtype):
    """Kernel specialized at trace time on (separate key?, mask?, attn out?)."""

    def kernel(*refs):
        it = iter(refs)
        q_ref = next(it)                              # (tT, Dp)
        ctx_ref = next(it)                            # (Sp, Dp) original context
        key_ref = next(it) if has_key else None       # (Sp, Dp) projected context
        mask_ref = next(it) if has_mask else None     # (1, Sp) int32
        wc_ref = next(it)                             # (tT, Dp)
        attn_ref = next(it) if write_attn else None   # (tT, Sp)

        q = q_ref[...]
        if scale is not None:
            # Scale the small (tT, D) tile, not the (tT, S) score tile.
            q = q * jnp.asarray(scale, dtype=q.dtype)
        ctx = ctx_ref[...]
        key = ctx if key_ref is None else key_ref[...]
        if mm_dtype is not None:
            q = q.astype(mm_dtype)
            ctx = ctx.astype(mm_dtype)
            key = key.astype(mm_dtype)

        # scores = q @ key^T as an NT dot_general (no XLU transpose), f32 acc.
        scores = lax.dot_general(
            q, key, dimension_numbers=(((1,), (1,)), ((), ())),
            preferred_element_type=jnp.float32)

        if has_mask:
            scores = jnp.where(mask_ref[...] != 0, jnp.float32(-100.0), scores)

        if write_attn:
            attn_ref[...] = scores.astype(attn_ref.dtype)

        # Exclude lane-padding columns from the softmax (the wrapper slices
        # them back off attn_, so only the normalization needs protecting).
        sm = scores
        if s_valid is not None:
            col = lax.broadcasted_iota(jnp.int32, scores.shape, 1)
            sm = jnp.where(col >= s_valid, jnp.float32(-1e30), scores)

        # softmax (== exp(log_softmax)) in f32 with an exact divide.
        m = jnp.max(sm, axis=-1, keepdims=True)
        p = jnp.exp(sm - m)
        denom = jnp.sum(p, axis=-1, keepdims=True)
        probs = p / denom

        # weighted_context = softmax(scores) @ context
        wc = jnp.dot(probs.astype(ctx.dtype), ctx,
                     preferred_element_type=jnp.float32)
        wc_ref[...] = wc.astype(wc_ref.dtype)

    return kernel


def scaled_attention(x, context, weight=None, mask=None, *, scale=1.0,
                     att_type="lbl", block_t=None, return_attn=True,
                     matmul_dtype=None, attn_dtype=None, pad_lanes=True):
    """Pallas implementation of ScaledAttention.forward.

    x:       (B, T, D)
    context: (B, S, D)
    weight:  (D, D) torch Linear layout (out, in); required iff att_type=='lbl'
    mask:    optional (B, S) bool / int
    Returns (weighted_context (B,T,D), attn_ (B,T,S) or None).
    """
    B, T, D = x.shape
    _, S, _ = context.shape
    use_proj = (att_type == "lbl")
    has_mask = mask is not None
    hp = lax.Precision.HIGHEST

    tune = _tpu_tuning()
    bt = int(block_t) if block_t is not None else tune["block_t"]

    # ---- Hoist the D^2 projection off the per-tile path; the (D,D) weight
    # ---- never enters VMEM.
    query, key = x, None
    scale_in_kernel = None
    if use_proj:
        assert weight is not None, "att_type='lbl' requires a weight"
        w32 = weight.astype(jnp.float32)
        if S < T:
            # scores = x @ (scale * context @ W)^T ; weighted_context still
            # uses the original context.  Saves B*(T-S)*D^2 projection FLOPs.
            key = (jnp.einsum("bso,od->bsd", context.astype(jnp.float32), w32,
                              precision=hp)
                   * jnp.float32(scale)).astype(context.dtype)
        else:
            query = (jnp.einsum("btd,od->bto", x.astype(jnp.float32), w32,
                                precision=hp)
                     * jnp.float32(scale)).astype(x.dtype)
    elif scale != 1.0:
        scale_in_kernel = float(scale)

    # ---- Target tiling.  Grid is (B outer, T-tiles inner): context's block
    # ---- index is constant across t, so it is not re-DMAed between T tiles.
    tT = T if T <= bt else bt
    if tune["two_cores"] and B * pl.cdiv(T, tT) < 2 and T > 8:
        tT = max(8, _round_up(pl.cdiv(T, 2), 8))   # give both TensorCores work

    # ---- Lane-dense outputs: pad S and D to multiples of 128 so both output
    # ---- stores are unmasked vst; pad columns are excluded from the softmax.
    Dp = _round_up(D, 128) if pad_lanes else D
    Sp = _round_up(S, 128) if pad_lanes else S
    s_valid = S if Sp != S else None

    q_p = _pad_dim(query, 2, Dp)
    ctx_p = _pad_dim(_pad_dim(context, 2, Dp), 1, Sp)
    args = [q_p, ctx_p]
    in_specs = [
        pl.BlockSpec((None, tT, Dp), lambda b, t: (b, t, 0)),   # query rows
        pl.BlockSpec((None, Sp, Dp), lambda b, t: (b, 0, 0)),   # context
        # TODO(synk): add pipeline_mode=pl.Buffered(1) on the context spec when
        # VMEM-constrained -- it is grid-invariant across t, so single
        # buffering only exposes one S*D DMA per batch boundary.
    ]
    if key is not None:
        args.append(_pad_dim(_pad_dim(key, 2, Dp), 1, Sp))
        in_specs.append(pl.BlockSpec((None, Sp, Dp), lambda b, t: (b, 0, 0)))
    if has_mask:
        mask_p = _pad_dim(mask.astype(jnp.int32).reshape(B, 1, S), 2, Sp)
        args.append(mask_p)
        in_specs.append(pl.BlockSpec((None, 1, Sp), lambda b, t: (b, 0, 0)))

    attn_dt = attn_dtype if attn_dtype is not None else x.dtype
    out_shapes = [jax.ShapeDtypeStruct((B, T, Dp), x.dtype)]
    out_specs = [pl.BlockSpec((None, tT, Dp), lambda b, t: (b, t, 0))]
    if return_attn:
        out_shapes.append(jax.ShapeDtypeStruct((B, T, Sp), attn_dt))
        out_specs.append(pl.BlockSpec((None, tT, Sp), lambda b, t: (b, t, 0)))

    kernel = _make_kernel(key is not None, has_mask, return_attn,
                          scale_in_kernel, s_valid, matmul_dtype)

    # TODO(synk): for very long S on v7x (64 MiB VMEM), add an S grid axis
    # marked "arbitrary" with flash-style online-softmax scratch so the
    # (tT, S) score tile stays bounded regardless of sequence length.
    outs = pl.pallas_call(
        kernel,
        out_shape=tuple(out_shapes),
        grid_spec=pltpu.PrefetchScalarGridSpec(
            num_scalar_prefetch=0,
            grid=(B, pl.cdiv(T, tT)),
            in_specs=in_specs,
            out_specs=tuple(out_specs),
        ),
        compiler_params=pltpu.CompilerParams(
            dimension_semantics=("parallel", "parallel"),
            vmem_limit_bytes=tune["vmem_limit"]),
    )(*args)

    wc_p = outs[0]
    wc = wc_p[:, :, :D] if Dp != D else wc_p
    if not return_attn:
        return wc, None
    attn_p = outs[1]
    attn_ = attn_p[:, :, :S] if Sp != S else attn_p
    return wc, attn_


def _reference(x, context, weight, mask, scale, att_type="lbl"):
    # Pure-JAX reference mirroring the PyTorch module.
    hp = lax.Precision.HIGHEST
    if att_type == "lbl":
        target = jnp.einsum("btd,od->bto", x, weight, precision=hp)
    else:
        target = x
    target = target * scale
    scores = jnp.einsum("btd,bsd->bts", target, context, precision=hp)
    if mask is not None:
        scores = jnp.where(mask[:, None, :], -100.0, scores)
    probs = jax.nn.softmax(scores, axis=-1)   # == exp(log_softmax)
    wc = jnp.einsum("bts,bsd->btd", probs, context, precision=hp)
    return wc, scores


if __name__ == "__main__":
    key = jax.random.PRNGKey(0)
    B, T, S, D = 2, 8, 16, 32
    scale = 0.5

    k1, k2, k3, k4 = jax.random.split(key, 4)
    x = jax.random.normal(k1, (B, T, D), dtype=jnp.float32)
    context = jax.random.normal(k2, (B, S, D), dtype=jnp.float32)
    # Deterministic Linear(dim, dim, bias=False) weight, torch layout (out, in).
    weight = (jax.random.normal(k3, (D, D), dtype=jnp.float32)
              * (1.0 / jnp.sqrt(D)))
    mask = jax.random.bernoulli(k4, 0.25, (B, S))

    # 1) att_type='lbl' with mask (S >= T: projection hoisted onto x).
    wc, attn_ = scaled_attention(x, context, weight, mask=mask, scale=scale)
    jax.block_until_ready((wc, attn_))
    wc_ref, attn_ref = _reference(x, context, weight, mask, scale, "lbl")
    assert jnp.allclose(attn_, attn_ref, atol=2e-4, rtol=2e-4)
    assert jnp.allclose(wc, wc_ref, atol=2e-3, rtol=2e-3)

    # 2) att_type='lbl' without mask (specialized kernel: no mask DMA/select).
    wc2, attn2 = scaled_attention(x, context, weight, mask=None, scale=scale)
    jax.block_until_ready((wc2, attn2))
    wc2_ref, attn2_ref = _reference(x, context, weight, None, scale, "lbl")
    assert jnp.allclose(attn2, attn2_ref, atol=2e-4, rtol=2e-4)
    assert jnp.allclose(wc2, wc2_ref, atol=2e-3, rtol=2e-3)

    # 3) att_type != 'lbl' (no projection; scale applied to the x tile in-kernel).
    wc3, attn3 = scaled_attention(x, context, None, mask=mask, scale=scale,
                                  att_type="dot")
    jax.block_until_ready((wc3, attn3))
    wc3_ref, attn3_ref = _reference(x, context, None, mask, scale, "dot")
    assert jnp.allclose(attn3, attn3_ref, atol=2e-4, rtol=2e-4)
    assert jnp.allclose(wc3, wc3_ref, atol=2e-3, rtol=2e-3)

    # 4) T > S: exercises the ctx-projection reassociation path (lbl + mask).
    T2 = 32
    x2 = jax.random.normal(jax.random.PRNGKey(5), (B, T2, D), dtype=jnp.float32)
    wc4, attn4 = scaled_attention(x2, context, weight, mask=mask, scale=scale)
    jax.block_until_ready((wc4, attn4))
    wc4_ref, attn4_ref = _reference(x2, context, weight, mask, scale, "lbl")
    assert jnp.allclose(attn4, attn4_ref, atol=5e-4, rtol=5e-4)
    assert jnp.allclose(wc4, wc4_ref, atol=2e-3, rtol=2e-3)

    # 5) return_attn=False path (skips the (B,T,S) HBM writeback).
    wc5, none_attn = scaled_attention(x, context, weight, mask=mask,
                                      scale=scale, return_attn=False)
    jax.block_until_ready(wc5)
    assert none_attn is None
    assert jnp.allclose(wc5, wc_ref, atol=2e-3, rtol=2e-3)

    # 6) bf16 MXU path (f32 accumulation) -- sanity check only.
    wc6, attn6 = scaled_attention(x, context, weight, mask=mask, scale=scale,
                                  matmul_dtype=jnp.bfloat16)
    jax.block_until_ready((wc6, attn6))
    assert bool(jnp.isfinite(wc6).all()) and bool(jnp.isfinite(attn6).all())

    print("KERNEL_OK")
</pallas_src>

<mosaic_0001>
module attributes {stable_mosaic.version = 11 : i64} {
  func.func @kernel(%arg0: i32, %arg1: i32, %arg2: memref<1x8x128xf32, #tpu.memory_space<vmem>>, %arg3: memref<1x128x128xf32, #tpu.memory_space<vmem>>, %arg4: memref<1x1x128xi32, #tpu.memory_space<vmem>>, %arg5: memref<1x8x128xf32, #tpu.memory_space<vmem>>, %arg6: memref<1x8x128xf32, #tpu.memory_space<vmem>>) attributes {dimension_semantics = [#tpu.dimension_semantics<parallel>, #tpu.dimension_semantics<parallel>], iteration_bounds = array<i64: 2, 1>, scalar_prefetch = 0 : i64, scratch_operands = 0 : i64, tpu.core_type = #tpu.core_type<tc>, window_params = [{transform_indices = @transform_0, window_bounds = array<i64: 1, 8, 128>}, {transform_indices = @transform_1, window_bounds = array<i64: 1, 128, 128>}, {transform_indices = @transform_2, window_bounds = array<i64: 1, 1, 128>}, {transform_indices = @transform_3, window_bounds = array<i64: 1, 8, 128>}, {transform_indices = @transform_4, window_bounds = array<i64: 1, 8, 128>}]} {
    %c0 = arith.constant 0 : index
    %c0_0 = arith.constant 0 : index
    %c0_1 = arith.constant 0 : index
    %0 = vector.load %arg2[%c0, %c0_0, %c0_1] : memref<1x8x128xf32, #tpu.memory_space<vmem>>, vector<1x8x128xf32>
    %1 = vector.shape_cast %0 : vector<1x8x128xf32> to vector<8x128xf32>
    %c0_2 = arith.constant 0 : index
    %c0_3 = arith.constant 0 : index
    %c0_4 = arith.constant 0 : index
    %2 = vector.load %arg3[%c0_2, %c0_3, %c0_4] : memref<1x128x128xf32, #tpu.memory_space<vmem>>, vector<1x128x128xf32>
    %3 = vector.shape_cast %2 : vector<1x128x128xf32> to vector<128x128xf32>
    %cst = arith.constant dense<0.000000e+00> : vector<8x128xf32>
    %4 = tpu.matmul %1, %3, %cst {dimension_numbers = #tpu.dot_dimension_numbers<[1], [1], [0], [0], [0, 0, 1, 0], [], []>} : vector<8x128xf32>, vector<128x128xf32>, vector<8x128xf32> -> vector<8x128xf32>
    %c0_5 = arith.constant 0 : index
    %c0_6 = arith.constant 0 : index
    %c0_7 = arith.constant 0 : index
    %5 = vector.load %arg4[%c0_5, %c0_6, %c0_7] : memref<1x1x128xi32, #tpu.memory_space<vmem>>, vector<1x1x128xi32>
    %6 = vector.shape_cast %5 : vector<1x1x128xi32> to vector<1x128xi32>
    %c0_i32 = arith.constant 0 : i32
    %7 = vector.broadcast %c0_i32 : i32 to vector<1x128xi32>
    %8 = arith.cmpi ne, %6, %7 : vector<1x128xi32>
    %cst_8 = arith.constant -1.000000e+02 : f32
    %9 = vector.shape_cast %8 : vector<1x128xi1> to vector<1x128xi1>
    %10 = vector.broadcast %9 : vector<1x128xi1> to vector<8x128xi1>
    %11 = vector.broadcast %cst_8 : f32 to vector<8x128xf32>
    %12 = arith.select %10, %11, %4 : vector<8x128xi1>, vector<8x128xf32>
    %c0_9 = arith.constant 0 : index
    %c0_10 = arith.constant 0 : index
    %c0_11 = arith.constant 0 : index
    %13 = vector.load %arg6[%c0_9, %c0_10, %c0_11] : memref<1x8x128xf32, #tpu.memory_space<vmem>>, vector<1x8x128xf32>
    %14 = vector.shape_cast %13 : vector<1x8x128xf32> to vector<8x128xf32>
    %15 = vector.shape_cast %12 : vector<8x128xf32> to vector<1x8x128xf32>
    tpu.vector_store %arg6[%c0_9, %c0_10, %c0_11], %15 {strides = array<i32>} : memref<1x8x128xf32, #tpu.memory_space<vmem>>, vector<1x8x128xf32>,
    %16 = tpu.iota {dimensions = array<i32: 1>} : vector<8x128xi32>
    %c16_i32 = arith.constant 16 : i32
    %17 = vector.broadcast %c16_i32 : i32 to vector<8x128xi32>
    %18 = arith.cmpi sge, %16, %17 : vector<8x128xi32>
    %cst_12 = arith.constant -1.000000e+30 : f32
    %19 = vector.broadcast %cst_12 : f32 to vector<8x128xf32>
    %20 = arith.select %18, %19, %12 : vector<8x128xi1>, vector<8x128xf32>
    %cst_13 = arith.constant dense<0xFF800000> : vector<8xf32>
    %21 = vector.multi_reduction <maximumf>, %20, %cst_13 [1] : vector<8x128xf32> to vector<8xf32>
    %22 = vector.shape_cast %21 : vector<8xf32> to vector<8x1xf32>
    %23 = vector.broadcast %22 : vector<8x1xf32> to vector<8x128xf32>
    %24 = arith.subf %20, %23 : vector<8x128xf32>
    %25 = math.exp %24 : vector<8x128xf32>
    %cst_14 = arith.constant dense<0.000000e+00> : vector<8xf32>
    %26 = vector.multi_reduction <add>, %25, %cst_14 [1] : vector<8x128xf32> to vector<8xf32>
    %27 = vector.shape_cast %26 : vector<8xf32> to vector<8x1xf32>
    %28 = vector.broadcast %27 : vector<8x1xf32> to vector<8x128xf32>
    %29 = arith.divf %25, %28 : vector<8x128xf32>
    %cst_15 = arith.constant dense<0.000000e+00> : vector<8x128xf32>
    %30 = tpu.matmul %29, %3, %cst_15 {dimension_numbers = #tpu.dot_dimension_numbers<[1], [0], [0], [1], [0, 0, 1, 1], [], []>} : vector<8x128xf32>, vector<128x128xf32>, vector<8x128xf32> -> vector<8x128xf32>
    %c0_16 = arith.constant 0 : index
    %c0_17 = arith.constant 0 : index
    %c0_18 = arith.constant 0 : index
    %31 = vector.load %arg5[%c0_16, %c0_17, %c0_18] : memref<1x8x128xf32, #tpu.memory_space<vmem>>, vector<1x8x128xf32>
    %32 = vector.shape_cast %31 : vector<1x8x128xf32> to vector<8x128xf32>
    %33 = vector.shape_cast %30 : vector<8x128xf32> to vector<1x8x128xf32>
    tpu.vector_store %arg5[%c0_16, %c0_17, %c0_18], %33 {strides = array<i32>} : memref<1x8x128xf32, #tpu.memory_space<vmem>>, vector<1x8x128xf32>,
    return
  }
  func.func @transform_0(%arg0: i32, %arg1: i32) -> (i32, i32, i32) {
    %c0_i32 = arith.constant 0 : i32
    %c0_i32_0 = arith.constant 0 : i32
    return %arg0, %arg1, %c0_i32 : i32, i32, i32
  }
  func.func @transform_1(%arg0: i32, %arg1: i32) -> (i32, i32, i32) {
    %c0_i32 = arith.constant 0 : i32
    %c0_i32_0 = arith.constant 0 : i32
    %c0_i32_1 = arith.constant 0 : i32
    return %arg0, %c0_i32, %c0_i32_0 : i32, i32, i32
  }
  func.func @transform_2(%arg0: i32, %arg1: i32) -> (i32, i32, i32) {
    %c0_i32 = arith.constant 0 : i32
    %c0_i32_0 = arith.constant 0 : i32
    %c0_i32_1 = arith.constant 0 : i32
    return %arg0, %c0_i32, %c0_i32_0 : i32, i32, i32
  }
  func.func @transform_3(%arg0: i32, %arg1: i32) -> (i32, i32, i32) {
    %c0_i32 = arith.constant 0 : i32
    %c0_i32_0 = arith.constant 0 : i32
    return %arg0, %arg1, %c0_i32 : i32, i32, i32
  }
  func.func @transform_4(%arg0: i32, %arg1: i32) -> (i32, i32, i32) {
    %c0_i32 = arith.constant 0 : i32
    %c0_i32_0 = arith.constant 0 : i32
    return %arg0, %arg1, %c0_i32 : i32, i32, i32
  }
}

</mosaic_0001>

<llo_original>
// kernel: tpu_custom_call.1
$region0: #{tpu_custom_call.1}
  #allocation0 [shape = 'u32[]', space=smem, size = 0x4, offset = 0x4, fixed_abs, tag = 'smem constant byte address 0x4 - core index']
  #allocation1 [shape = 'u32[144,128]{1,0:T(1,128)}', space=vmem, size = 0x12000, scoped, tag = 'internal scratch']
  %s0 = inlined_call_operand.hbm [shape: f32[2,8,128], index: 0, kind: input, shape index: {}]
  %s1 = inlined_call_operand.hbm [shape: f32[2,128,128], index: 1, kind: input, shape index: {}]
  %s2 = inlined_call_operand.hbm [shape: s32[2,1,128], index: 2, kind: input, shape index: {}]
  %s3 = inlined_call_operand.hbm [shape: f32[2,8,128], index: 3, kind: output, shape index: {0}]
  %s4 = inlined_call_operand.hbm [shape: f32[2,8,128], index: 4, kind: output, shape index: {1}]
  %5 = xla_tuple %s3, %s4
  %s6 = sld [smem:[#allocation0]]
  $region65: #{tpu_custom_call.1} parent=0
    _
  %s8 = ssub.s32 1, %s6
  %s9 = scalar_select 0, %s8, %s6
  $region1: #{tpu_custom_call.1} parent=0
    #allocation2 [shape = 'u8[8192]{0}', space=vmem, size = 0x2000, scoped, tag = 'input window, operand 0']
    #allocation3 [shape = 's32[2]{0}', space=sflag, size = 0x8, scoped, tag = 'scoped memory for tpu_custom_call.1']
    #allocation4 [shape = 's32[2]{0}', space=sflag, size = 0x8, scoped, tag = 'scoped memory for tpu_custom_call.1']
    #allocation5 [shape = 'u8[131072]{0}', space=vmem, size = 0x20000, scoped, tag = 'input window, operand 1']
    #allocation6 [shape = 's32[2]{0}', space=sflag, size = 0x8, scoped, tag = 'scoped memory for tpu_custom_call.1']
    #allocation7 [shape = 'u8[1024]{0}', space=vmem, size = 0x400, scoped, tag = 'input window, operand 2']
    #allocation8 [shape = 'u8[8192]{0}', space=vmem, size = 0x2000, scoped, tag = 'output window, operand 0']
    #allocation9 [shape = 'u8[8192]{0}', space=vmem, size = 0x2000, scoped, tag = 'output window, operand 1']
    #allocation10 [shape = 's32[2]{0}', space=sflag, size = 0x8, scoped, tag = 'scoped memory for tpu_custom_call.1']
    %10 = vsyncpa [#allocation3], 0
    %s11 = scalar_lea.sflag [#allocation3], 1
    %12 = vsyncpa %s11, 0
    %13 = vsyncpa [#allocation6], 0
    %s14 = scalar_lea.sflag [#allocation6], 1
    %15 = vsyncpa %s14, 0
    %16 = vsyncpa [#allocation4], 0
    %s17 = scalar_lea.sflag [#allocation4], 1
    %18 = vsyncpa %s17, 0
    %19 = vsyncpa [#allocation10], 0
    %s20 = scalar_lea.sflag [#allocation10], 1
    %21 = vsyncpa %s20, 0
    loop: start=0, step=1, limit=4
    $region2: #{tpu_custom_call.1} parent=1 // loop_pre_header
      _
    $region3: #{tpu_custom_call.1} parent=1 // loop_header
      %s23 = sphi 0, %s27
      %p24 = scmp.ge.s32.totalorder %s23, 4
      %s30 = sphi 0, %s42
      %s31 = sphi 0, %s38
      %s32 = sphi 0, %s30
      %s33 = sphi 0, %s31
      %s34 = sphi 0, %s32
      %s35 = sphi 0, %s33
      %s47 = sphi 0, %s49
      %s50 = sphi 0, %s47
      %s51 = sphi 0, %s50
      %s67 = sphi 0, %s51
      %s73 = sphi 0, %s75
      %s76 = sphi 0, %s73
      %s77 = sphi 0, %s76
      %s93 = sphi 0, %s77
      %s99 = sphi 0, %s101
      %s102 = sphi 0, %s99
      %s103 = sphi 0, %s102
      %s119 = sphi 0, %s103
      %s127 = sphi 0, %s129
      %s130 = sphi 0, %s127
      %s131 = sphi 0, %s130
      %s147 = sphi 0, %s131
      %s155 = sphi 0, %s157
      %s158 = sphi 0, %s155
      %s159 = sphi 0, %s158
      %s175 = sphi 0, %s159
    $region4: #{tpu_custom_call.1} parent=1 // loop_header_branch
      %26 = sbr.rel (%p24) target = $region8
    $region5: #{tpu_custom_call.1} parent=1 // loop_body
      %s28 = ssub.s32 %s23, 1
      %s29 = ssub.s32 %s23, 2
      %s36 = sadd.s32 1, %s31
      %p37 = scmp.ge.s32.totalorder %s36, 1
      %s38 = scalar_select %p37, 0, %s36
      %s39 = sadd.s32 1, %s30
      %s40 = scalar_select %p37, %s39, %s30
      %p41 = scmp.ge.s32.totalorder %s40, 2
      %s42 = scalar_select %p41, 0, %s40
      %s43 = ssub.s32 %s30, %s42
      %s44 = ssub.s32 %s31, %s38
      %s45 = sor.u32 %s43, %s44
      %p46 = scmp.eq.s32.totalorder %s45, 0
      %s48 = sadd.s32 %s47, 1
      %s49 = scalar_select %p46, %s47, %s48
      %p52 = pneg %p46
      %p53 = scmp.eq.s32.totalorder %s23, 1
      %p54 = por %p52, %p53
      %p55 = scmp.ne.s32.totalorder %s47, %s50
      %p56 = scmp.eq.s32.totalorder %s23, 0
      %p57 = por %p55, %p56
      %p58 = scmp.ne.s32.totalorder %s47, %s50
      %p59 = scmp.eq.s32.totalorder %s28, 1
      %p60 = por %p58, %p59
      %p61 = scmp.ne.s32.totalorder %s50, %s51
      %p62 = scmp.eq.s32.totalorder %s28, 0
      %p63 = por %p61, %p62
      %p64 = scmp.ne.s32.totalorder %s50, %s51
      %p65 = scmp.eq.s32.totalorder %s29, 1
      %p66 = por %p64, %p65
      %p68 = scmp.ne.s32.totalorder %s51, %s67
      %p69 = scmp.eq.s32.totalorder %s29, 0
      %p70 = por %p68, %p69
      %s71 = ssub.s32 %s30, %s42
      %p72 = scmp.eq.s32.totalorder %s71, 0
      %s74 = sadd.s32 %s73, 1
      %s75 = scalar_select %p72, %s73, %s74
      %p78 = pneg %p72
      %p79 = scmp.eq.s32.totalorder %s23, 1
      %p80 = por %p78, %p79
      %p81 = scmp.ne.s32.totalorder %s73, %s76
      %p82 = scmp.eq.s32.totalorder %s23, 0
      %p83 = por %p81, %p82
      %p84 = scmp.ne.s32.totalorder %s73, %s76
      %p85 = scmp.eq.s32.totalorder %s28, 1
      %p86 = por %p84, %p85
      %p87 = scmp.ne.s32.totalorder %s76, %s77
      %p88 = scmp.eq.s32.totalorder %s28, 0
      %p89 = por %p87, %p88
      %p90 = scmp.ne.s32.totalorder %s76, %s77
      %p91 = scmp.eq.s32.totalorder %s29, 1
      %p92 = por %p90, %p91
      %p94 = scmp.ne.s32.totalorder %s77, %s93
      %p95 = scmp.eq.s32.totalorder %s29, 0
      %p96 = por %p94, %p95
      %s97 = ssub.s32 %s30, %s42
      %p98 = scmp.eq.s32.totalorder %s97, 0
      %s100 = sadd.s32 %s99, 1
      %s101 = scalar_select %p98, %s99, %s100
      %p104 = pneg %p98
      %p105 = scmp.eq.s32.totalorder %s23, 1
      %p106 = por %p104, %p105
      %p107 = scmp.ne.s32.totalorder %s99, %s102
      %p108 = scmp.eq.s32.totalorder %s23, 0
      %p109 = por %p107, %p108
      %p110 = scmp.ne.s32.totalorder %s99, %s102
      %p111 = scmp.eq.s32.totalorder %s28, 1
      %p112 = por %p110, %p111
      %p113 = scmp.ne.s32.totalorder %s102, %s103
      %p114 = scmp.eq.s32.totalorder %s28, 0
      %p115 = por %p113, %p114
      %p116 = scmp.ne.s32.totalorder %s102, %s103
      %p117 = scmp.eq.s32.totalorder %s29, 1
      %p118 = por %p116, %p117
      %p120 = scmp.ne.s32.totalorder %s103, %s119
      %p121 = scmp.eq.s32.totalorder %s29, 0
      %p122 = por %p120, %p121
      %s123 = ssub.s32 %s30, %s42
      %s124 = ssub.s32 %s31, %s38
      %s125 = sor.u32 %s123, %s124
      %p126 = scmp.eq.s32.totalorder %s125, 0
      %s128 = sadd.s32 %s127, 1
      %s129 = scalar_select %p126, %s127, %s128
      %p132 = pneg %p126
      %p133 = scmp.eq.s32.totalorder %s23, 1
      %p134 = por %p132, %p133
      %p135 = scmp.ne.s32.totalorder %s127, %s130
      %p136 = scmp.eq.s32.totalorder %s23, 0
      %p137 = por %p135, %p136
      %p138 = scmp.ne.s32.totalorder %s127, %s130
      %p139 = scmp.eq.s32.totalorder %s28, 1
      %p140 = por %p138, %p139
      %p141 = scmp.ne.s32.totalorder %s130, %s131
      %p142 = scmp.eq.s32.totalorder %s28, 0
      %p143 = por %p141, %p142
      %p144 = scmp.ne.s32.totalorder %s130, %s131
      %p145 = scmp.eq.s32.totalorder %s29, 1
      %p146 = por %p144, %p145
      %p148 = scmp.ne.s32.totalorder %s131, %s147
      %p149 = scmp.eq.s32.totalorder %s29, 0
      %p150 = por %p148, %p149
      %s151 = ssub.s32 %s30, %s42
      %s152 = ssub.s32 %s31, %s38
      %s153 = sor.u32 %s151, %s152
      %p154 = scmp.eq.s32.totalorder %s153, 0
      %s156 = sadd.s32 %s155, 1
      %s157 = scalar_select %p154, %s155, %s156
      %p160 = pneg %p154
      %p161 = scmp.eq.s32.totalorder %s23, 1
      %p162 = por %p160, %p161
      %p163 = scmp.ne.s32.totalorder %s155, %s158
      %p164 = scmp.eq.s32.totalorder %s23, 0
      %p165 = por %p163, %p164
      %p166 = scmp.ne.s32.totalorder %s155, %s158
      %p167 = scmp.eq.s32.totalorder %s28, 1
      %p168 = por %p166, %p167
      %p169 = scmp.ne.s32.totalorder %s158, %s159
      %p170 = scmp.eq.s32.totalorder %s28, 0
      %p171 = por %p169, %p170
      %p172 = scmp.ne.s32.totalorder %s158, %s159
      %p173 = scmp.eq.s32.totalorder %s29, 1
      %p174 = por %p172, %p173
      %p176 = scmp.ne.s32.totalorder %s159, %s175
      %p177 = scmp.eq.s32.totalorder %s29, 0
      %p178 = por %p176, %p177
      %p179 = scmp.le.s32.totalorder 1, %s23
      %p180 = scmp.lt.s32.totalorder %s23, 3
      %p181 = pnand %p179, %p180
      %p182 = pneg %p181
      // Predicated region
      $region9: #{tpu_custom_call.1} parent=5 // pred_check
        _
      $region10: #{tpu_custom_call.1} parent=5 // pred_check_branch
        %184 = sbr.rel (%p181) target = $region12
      $region11: #{tpu_custom_call.1} parent=5 // pred_region
        %s185 = ssub.s32 %s23, 1
      $region12: #{tpu_custom_call.1} parent=5 // pred_fallthru
        _
      %p186 = scmp.lt.s32.totalorder %s23, 2
      // Predicated region
      $region13: #{tpu_custom_call.1} parent=5 // pred_check
        %p187 = pneg %p186
      $region14: #{tpu_custom_call.1} parent=5 // pred_check_branch
        %189 = sbr.rel (%p187) target = $region16
      $region15: #{tpu_custom_call.1} parent=5 // pred_region
        // Predicated region
        $region17: #{tpu_custom_call.1} parent=15 // pred_check
          %p190 = pneg %p57
        $region18: #{tpu_custom_call.1} parent=15 // pred_check_branch
          %192 = sbr.rel (%p190) target = $region20
        $region19: #{tpu_custom_call.1} parent=15 // pred_region
          %s193 = sand.u32 %s47, 1
          %s194 = scalar_lea.sflag [#allocation3], %s193
          %s195 = sand.u32 %s47, 1
          %s196 = smul.addr %s195, 8
          %s197 = scalar_lea.vmem [#allocation2], %s196
          %s199 = ssub.s32 128, 128
          %200 = vsyncadd %s194, %s199
          %s201 = sadd.s32 %s31, %s30
          %s202 = smul.addr %s201, 128
          %s203 = scalar_lea.hbm %s0, %s202
          %s205 = sshll.u32 %s197, 4
          %s206 = int_to_ptr.vmem [resolvable:$true] %s205
          %208 = dma.hbm_to_vmem [thread:$0]  %s203, 128, %s206, %s194
        $region20: #{tpu_custom_call.1} parent=15 // pred_fallthru
          _
        // Predicated region
        $region21: #{tpu_custom_call.1} parent=15 // pred_check
          %p209 = pneg %p83
        $region22: #{tpu_custom_call.1} parent=15 // pred_check_branch
          %211 = sbr.rel (%p209) target = $region24
        $region23: #{tpu_custom_call.1} parent=15 // pred_region
          %s212 = sand.u32 %s23, 1
          %s213 = scalar_lea.sflag [#allocation6], %s212
          %s214 = sand.u32 %s73, 1
          %s215 = smul.addr %s214, 128
          %s216 = scalar_lea.vmem [#allocation5], %s215
          %s218 = ssub.s32 2048, 2048
          %219 = vsyncadd %s213, %s218
          %s220 = smul.addr %s30, 16
          %s221 = smul.addr %s220, 128
          %s222 = scalar_lea.hbm %s1, %s221
          %s223 = sshll.u32 %s216, 4
          %s224 = int_to_ptr.vmem [resolvable:$true] %s223
          %229 = dma.hbm_to_vmem [thread:$0]  %s222, 2048, %s224, %s213, 128, 128, 8
        $region24: #{tpu_custom_call.1} parent=15 // pred_fallthru
          _
        // Predicated region
        $region25: #{tpu_custom_call.1} parent=15 // pred_check
          %p230 = pneg %p109
        $region26: #{tpu_custom_call.1} parent=15 // pred_check_branch
          %232 = sbr.rel (%p230) target = $region28
        $region27: #{tpu_custom_call.1} parent=15 // pred_region
          %s233 = sand.u32 %s23, 1
          %s234 = scalar_lea.sflag [#allocation6], %s233
          %s235 = sand.u32 %s99, 1
          %s236 = scalar_lea.vmem [#allocation7], %s235
          %s238 = ssub.s32 16, 16
          %239 = vsyncadd %s234, %s238
          %s240 = smul.addr %s30, 16
          %s241 = scalar_lea.hbm %s2, %s240
          %s243 = sshll.u32 %s236, 4
          %s244 = int_to_ptr.vmem [resolvable:$true] %s243
          %246 = dma.hbm_to_vmem [thread:$0]  %s241, 16, %s244, %s234
        $region28: #{tpu_custom_call.1} parent=15 // pred_fallthru
          _
      $region16: #{tpu_custom_call.1} parent=5 // pred_fallthru
        _
      %p247 = scmp.le.s32.totalorder 1, %s23
      %p248 = scmp.lt.s32.totalorder %s23, 3
      %p249 = pnand %p247, %p248
      %p250 = pneg %p249
      // Predicated region
      $region29: #{tpu_custom_call.1} parent=5 // pred_check
        _
      $region30: #{tpu_custom_call.1} parent=5 // pred_check_branch
        %252 = sbr.rel (%p249) target = $region32
      $region31: #{tpu_custom_call.1} parent=5 // pred_region
        %s253 = ssub.s32 %s23, 1
        %s254 = sand.u32 %s50, 1
        %s255 = scalar_lea.sflag [#allocation3], %s254
        %s256 = sand.u32 %s50, 1
        %s257 = smul.addr %s256, 8
        %s258 = scalar_lea.vmem [#allocation2], %s257
        // Predicated region
        $region33: #{tpu_custom_call.1} parent=31 // pred_check
          %p259 = pneg %p63
        $region34: #{tpu_custom_call.1} parent=31 // pred_check_branch
          %261 = sbr.rel (%p259) target = $region36
        $region35: #{tpu_custom_call.1} parent=31 // pred_region
          %262 = dma.done %s255, 128
        $region36: #{tpu_custom_call.1} parent=31 // pred_fallthru
          _
        %s263 = sand.u32 %s28, 1
        %s264 = scalar_lea.sflag [#allocation6], %s263
        %s265 = sand.u32 %s76, 1
        %s266 = smul.addr %s265, 128
        %s267 = scalar_lea.vmem [#allocation5], %s266
        // Predicated region
        $region37: #{tpu_custom_call.1} parent=31 // pred_check
          %p268 = pneg %p89
        $region38: #{tpu_custom_call.1} parent=31 // pred_check_branch
          %270 = sbr.rel (%p268) target = $region40
        $region39: #{tpu_custom_call.1} parent=31 // pred_region
          %271 = dma.done %s264, 2048
        $region40: #{tpu_custom_call.1} parent=31 // pred_fallthru
          _
        %s272 = sand.u32 %s28, 1
        %s273 = scalar_lea.sflag [#allocation6], %s272
        %s274 = sand.u32 %s102, 1
        %s275 = scalar_lea.vmem [#allocation7], %s274
        // Predicated region
        $region41: #{tpu_custom_call.1} parent=31 // pred_check
          %p276 = pneg %p115
        $region42: #{tpu_custom_call.1} parent=31 // pred_check_branch
          %278 = sbr.rel (%p276) target = $region44
        $region43: #{tpu_custom_call.1} parent=31 // pred_region
          %279 = dma.done %s273, 16
        $region44: #{tpu_custom_call.1} parent=31 // pred_fallthru
          _
        %s280 = sand.u32 %s50, 1
        %s281 = scalar_lea.sflag [#allocation3], %s280
        %s282 = sand.u32 %s50, 1
        %s283 = smul.addr %s282, 8
        %s284 = scalar_lea.vmem [#allocation2], %s283
        %p285 = pneg %p63
        %p286 = pneg %p60
        %s287 = sand.u32 %s28, 1
        %s288 = scalar_lea.sflag [#allocation6], %s287
        %s289 = sand.u32 %s76, 1
        %s290 = smul.addr %s289, 128
        %s291 = scalar_lea.vmem [#allocation5], %s290
        %p292 = pneg %p89
        %p293 = pneg %p86
        %s294 = sand.u32 %s28, 1
        %s295 = scalar_lea.sflag [#allocation6], %s294
        %s296 = sand.u32 %s102, 1
        %s297 = scalar_lea.vmem [#allocation7], %s296
        %p298 = pneg %p115
        %p299 = pneg %p112
        %p300 = pneg %p143
        %p301 = pneg %p140
        %s302 = sand.u32 %s130, 1
        %s303 = scalar_lea.sflag [#allocation4], %s302
        %s304 = sand.u32 %s130, 1
        %s305 = smul.addr %s304, 8
        %s306 = scalar_lea.vmem [#allocation8], %s305
        %p307 = pneg %p171
        %p308 = pneg %p168
        %s309 = sand.u32 %s158, 1
        %s310 = scalar_lea.sflag [#allocation10], %s309
        %s311 = sand.u32 %s158, 1
        %s312 = smul.addr %s311, 8
        %s313 = scalar_lea.vmem [#allocation9], %s312
        %v314 = vld [vmem:[%s258] sm:$0xff]
        %v315 = vld [vmem:[%s267] sm:$0xff]
        %v316 = vld [vmem:[%s267 + $0x8] sm:$0xff]
        %v317 = vld [vmem:[%s267 + $0x10] sm:$0xff]
        %v318 = vld [vmem:[%s267 + $0x18] sm:$0xff]
        %v319 = vld [vmem:[%s267 + $0x20] sm:$0xff]
        %v320 = vld [vmem:[%s267 + $0x28] sm:$0xff]
        %v321 = vld [vmem:[%s267 + $0x30] sm:$0xff]
        %v322 = vld [vmem:[%s267 + $0x38] sm:$0xff]
        %v323 = vld [vmem:[%s267 + $0x40] sm:$0xff]
        %v324 = vld [vmem:[%s267 + $0x48] sm:$0xff]
        %v325 = vld [vmem:[%s267 + $0x50] sm:$0xff]
        %v326 = vld [vmem:[%s267 + $0x58] sm:$0xff]
        %v327 = vld [vmem:[%s267 + $0x60] sm:$0xff]
        %v328 = vld [vmem:[%s267 + $0x68] sm:$0xff]
        %v329 = vld [vmem:[%s267 + $0x70] sm:$0xff]
        %v330 = vld [vmem:[%s267 + $0x78] sm:$0xff]
        %331 = vmatprep.subr.mxu0 0.0
        %332 = vmatpush1.xpose.msra.mxu0 %v315
        %333 = vmatprep.subr.mxu0 0.0
        %334 = vmatpush1.xpose.msra.mxu0 %v316
        %335 = vmatprep.subr.mxu0 0.0
        %336 = vmatpush1.xpose.msra.mxu0 %v317
        %337 = vmatprep.subr.mxu0 0.0
        %338 = vmatpush1.xpose.msra.mxu0 %v318
        %339 = vmatprep.subr.mxu0 0.0
        %340 = vmatpush1.xpose.msra.mxu0 %v319
        %341 = vmatprep.subr.mxu0 0.0
        %342 = vmatpush1.xpose.msra.mxu0 %v320
        %343 = vmatprep.subr.mxu0 0.0
        %344 = vmatpush1.xpose.msra.mxu0 %v321
        %345 = vmatprep.subr.mxu0 0.0
        %346 = vmatpush1.xpose.msra.mxu0 %v322
        %347 = vmatprep.subr.mxu0 0.0
        %348 = vmatpush1.xpose.msra.mxu0 %v323
        %349 = vmatprep.subr.mxu0 0.0
        %350 = vmatpush1.xpose.msra.mxu0 %v324
        %351 = vmatprep.subr.mxu0 0.0
        %352 = vmatpush1.xpose.msra.mxu0 %v325
        %353 = vmatprep.subr.mxu0 0.0
        %354 = vmatpush1.xpose.msra.mxu0 %v326
        %355 = vmatprep.subr.mxu0 0.0
        %356 = vmatpush1.xpose.msra.mxu0 %v327
        %357 = vmatprep.subr.mxu0 0.0
        %358 = vmatpush1.xpose.msra.mxu0 %v328
        %359 = vmatprep.subr.mxu0 0.0
        %360 = vmatpush1.xpose.msra.mxu0 %v329
        %361 = vmatprep.subr.mxu0 0.0
        %362 = vmatpush1.xpose.msra.mxu0 %v330
        %363 = vmatprep.subr.mxu0 0.0
        %364 = vmatpush1.xpose.msra.mxu0 0.0
        %365 = vmatprep.subr.mxu0 0.0
        %366 = vmatpush1.xpose.msra.mxu0 0.0
        %367 = vmatprep.subr.mxu0 0.0
        %368 = vmatpush1.xpose.msra.mxu0 0.0
        %369 = vmatprep.subr.mxu0 0.0
        %370 = vmatpush1.xpose.msra.mxu0 0.0
        %371 = vmatprep.subr.mxu0 0.0
        %372 = vmatpush1.xpose.msra.mxu0 0.0
        %373 = vmatprep.subr.mxu0 0.0
        %374 = vmatpush1.xpose.msra.mxu0 0.0
        %375 = vmatprep.subr.mxu0 0.0
        %376 = vmatpush1.xpose.msra.mxu0 0.0
        %377 = vmatprep.subr.mxu0 0.0
        %378 = vmatpush1.xpose.msra.mxu0 0.0
        %379 = vmatprep.subr.mxu0 0.0
        %380 = vmatpush1.xpose.msra.mxu0 0.0
        %381 = vmatprep.subr.mxu0 0.0
        %382 = vmatpush1.xpose.msra.mxu0 0.0
        %383 = vmatprep.subr.mxu0 0.0
        %384 = vmatpush1.xpose.msra.mxu0 0.0
        %385 = vmatprep.subr.mxu0 0.0
        %386 = vmatpush1.xpose.msra.mxu0 0.0
        %387 = vmatprep.subr.mxu0 0.0
        %388 = vmatpush1.xpose.msra.mxu0 0.0
        %389 = vmatprep.subr.mxu0 0.0
        %390 = vmatpush1.xpose.msra.mxu0 0.0
        %391 = vmatprep.subr.mxu0 0.0
        %392 = vmatpush1.xpose.msra.mxu0 0.0
        %393 = vmatprep.subr.mxu0 0.0
        %394 = vmatpush1.xpose.msra.mxu0 0.0
        %395 = vmatprep.mubr.f32.mxu0 0.0
        %396 = vmatmul.mubr.f32.gmra.mrb[0].mxu0 %v314
        %v397 = vpop.f32.mrb[0].mxu0
        %v398 = vadd.f32 0.0, %v397
        %v399 = vpop.f32.mrb[0].mxu0
        %400 = vdwg.mxu0
        %v401 = vld [vmem:[%s275] sm:$0x1]
        %vm402 = vcmp.ne.s32.totalorder %v401, 0
        %v403 = vsel %vm402, 1, 0
        %v404 = vlaneseq
        %v405 = vshrl.u32 %v404, 7
        %v406 = vsub.s32 0, %v405
        %v407 = vrot.slane %v403, %v406
        %vm408 = vcmp.eq.s32.totalorder %v407, 1
        %v409 = vsel %vm408, -100.0, %v398
        %410 = vst [vmem:[%s313] sm:$0xff] %v409
        %v411 = vlaneseq
        %v412 = vand.u32 %v411, 127
        %vm413 = vcmp.ge.s32.totalorder %v412, 16
        %v414 = vsel %vm413, -1e+30, %v409
        %415 = vmax.xlane.f32.xlu0 %v414
        %v416 = vpop.xlane.xlu0 %415
        %v417 = vsub.f32 %v414, %v416
        %v418 = vmul.f32 %v417, 1.442695
        %v419 = vpow.pop %v418
        %420 = vadd.xlane.f32.xlu0 %v419
        %v421 = vpop.xlane.xlu0 %420
        %v422 = vrcp.pop %v421
        %v423 = vmul.f32 %v419, %v422
        %424 = vmatprep.subr.mxu0 0.0
        %425 = vmatpush1.msra.mxu0 %v315
        %426 = vmatprep.subr.mxu0 0.0
        %427 = vmatpush1.msra.mxu0 %v316
        %428 = vmatprep.subr.mxu0 0.0
        %429 = vmatpush1.msra.mxu0 %v317
        %430 = vmatprep.subr.mxu0 0.0
        %431 = vmatpush1.msra.mxu0 %v318
        %432 = vmatprep.subr.mxu0 0.0
        %433 = vmatpush1.msra.mxu0 %v319
        %434 = vmatprep.subr.mxu0 0.0
        %435 = vmatpush1.msra.mxu0 %v320
        %436 = vmatprep.subr.mxu0 0.0
        %437 = vmatpush1.msra.mxu0 %v321
        %438 = vmatprep.subr.mxu0 0.0
        %439 = vmatpush1.msra.mxu0 %v322
        %440 = vmatprep.subr.mxu0 0.0
        %441 = vmatpush1.msra.mxu0 %v323
        %442 = vmatprep.subr.mxu0 0.0
        %443 = vmatpush1.msra.mxu0 %v324
        %444 = vmatprep.subr.mxu0 0.0
        %445 = vmatpush1.msra.mxu0 %v325
        %446 = vmatprep.subr.mxu0 0.0
        %447 = vmatpush1.msra.mxu0 %v326
        %448 = vmatprep.subr.mxu0 0.0
        %449 = vmatpush1.msra.mxu0 %v327
        %450 = vmatprep.subr.mxu0 0.0
        %451 = vmatpush1.msra.mxu0 %v328
        %452 = vmatprep.subr.mxu0 0.0
        %453 = vmatpush1.msra.mxu0 %v329
        %454 = vmatprep.subr.mxu0 0.0
        %455 = vmatpush1.msra.mxu0 %v330
        %456 = vmatprep.subr.mxu0 0.0
        %457 = vmatpush1.msra.mxu0 0.0
        %458 = vmatprep.subr.mxu0 0.0
        %459 = vmatpush1.msra.mxu0 0.0
        %460 = vmatprep.subr.mxu0 0.0
        %461 = vmatpush1.msra.mxu0 0.0
        %462 = vmatprep.subr.mxu0 0.0
        %463 = vmatpush1.msra.mxu0 0.0
        %464 = vmatprep.subr.mxu0 0.0
        %465 = vmatpush1.msra.mxu0 0.0
        %466 = vmatprep.subr.mxu0 0.0
        %467 = vmatpush1.msra.mxu0 0.0
        %468 = vmatprep.subr.mxu0 0.0
        %469 = vmatpush1.msra.mxu0 0.0
        %470 = vmatprep.subr.mxu0 0.0
        %471 = vmatpush1.msra.mxu0 0.0
        %472 = vmatprep.subr.mxu0 0.0
        %473 = vmatpush1.msra.mxu0 0.0
        %474 = vmatprep.subr.mxu0 0.0
        %475 = vmatpush1.msra.mxu0 0.0
        %476 = vmatprep.subr.mxu0 0.0
        %477 = vmatpush1.msra.mxu0 0.0
        %478 = vmatprep.subr.mxu0 0.0
        %479 = vmatpush1.msra.mxu0 0.0
        %480 = vmatprep.subr.mxu0 0.0
        %481 = vmatpush1.msra.mxu0 0.0
        %482 = vmatprep.subr.mxu0 0.0
        %483 = vmatpush1.msra.mxu0 0.0
        %484 = vmatprep.subr.mxu0 0.0
        %485 = vmatpush1.msra.mxu0 0.0
        %486 = vmatprep.subr.mxu0 0.0
        %487 = vmatpush1.msra.mxu0 0.0
        %488 = vmatprep.mubr.f32.mxu0 0.0
        %489 = vmatmul.mubr.f32.gmra.mrb[0].mxu0 %v423
        %v490 = vpop.f32.mrb[0].mxu0
        %v491 = vadd.f32 0.0, %v490
        %v492 = vpop.f32.mrb[0].mxu0
        %493 = vdwg.mxu0
        %494 = vst [vmem:[%s306] sm:$0xff] %v491
        %s495 = sand.u32 %s130, 1
        %s496 = scalar_lea.sflag [#allocation4], %s495
        %s497 = sand.u32 %s130, 1
        %s498 = smul.addr %s497, 8
        %s499 = scalar_lea.vmem [#allocation8], %s498
        %s500 = sand.u32 %s158, 1
        %s501 = scalar_lea.sflag [#allocation10], %s500
        %s502 = sand.u32 %s158, 1
        %s503 = smul.addr %s502, 8
        %s504 = scalar_lea.vmem [#allocation9], %s503
        // Predicated region
        $region45: #{tpu_custom_call.1} parent=31 // pred_check
          %p505 = pneg %p140
        $region46: #{tpu_custom_call.1} parent=31 // pred_check_branch
          %507 = sbr.rel (%p505) target = $region48
        $region47: #{tpu_custom_call.1} parent=31 // pred_region
          %s509 = ssub.s32 128, 128
          %510 = vsyncadd %s496, %s509
          %s511 = sadd.s32 %s33, %s32
          %s512 = smul.addr %s511, 128
          %s513 = scalar_lea.hbm %s3, %s512
          %s515 = sshll.u32 %s499, 4
          %s516 = int_to_ptr.vmem [resolvable:$true] %s515
          %518 = dma.vmem_to_hbm [thread:$0]  %s516, 128, %s513, %s496
        $region48: #{tpu_custom_call.1} parent=31 // pred_fallthru
          _
        // Predicated region
        $region49: #{tpu_custom_call.1} parent=31 // pred_check
          %p519 = pneg %p168
        $region50: #{tpu_custom_call.1} parent=31 // pred_check_branch
          %521 = sbr.rel (%p519) target = $region52
        $region51: #{tpu_custom_call.1} parent=31 // pred_region
          %s523 = ssub.s32 128, 128
          %524 = vsyncadd %s501, %s523
          %s525 = sadd.s32 %s33, %s32
          %s526 = smul.addr %s525, 128
          %s527 = scalar_lea.hbm %s4, %s526
          %s529 = sshll.u32 %s504, 4
          %s530 = int_to_ptr.vmem [resolvable:$true] %s529
          %532 = dma.vmem_to_hbm [thread:$0]  %s530, 128, %s527, %s501
        $region52: #{tpu_custom_call.1} parent=31 // pred_fallthru
          _
      $region32: #{tpu_custom_call.1} parent=5 // pred_fallthru
        _
      %p533 = scmp.le.s32.totalorder 2, %s23
      // Predicated region
      $region53: #{tpu_custom_call.1} parent=5 // pred_check
        %p534 = pneg %p533
      $region54: #{tpu_custom_call.1} parent=5 // pred_check_branch
        %536 = sbr.rel (%p534) target = $region56
      $region55: #{tpu_custom_call.1} parent=5 // pred_region
        %s537 = ssub.s32 %s23, 2
        // Predicated region
        $region57: #{tpu_custom_call.1} parent=55 // pred_check
          %p538 = pneg %p146
        $region58: #{tpu_custom_call.1} parent=55 // pred_check_branch
          %540 = sbr.rel (%p538) target = $region60
        $region59: #{tpu_custom_call.1} parent=55 // pred_region
          %s541 = sand.u32 %s131, 1
          %s542 = scalar_lea.sflag [#allocation4], %s541
          %s543 = sand.u32 %s131, 1
          %s544 = smul.addr %s543, 8
          %s545 = scalar_lea.vmem [#allocation8], %s544
          %546 = dma.done %s542, 128
        $region60: #{tpu_custom_call.1} parent=55 // pred_fallthru
          _
        // Predicated region
        $region61: #{tpu_custom_call.1} parent=55 // pred_check
          %p547 = pneg %p174
        $region62: #{tpu_custom_call.1} parent=55 // pred_check_branch
          %549 = sbr.rel (%p547) target = $region64
        $region63: #{tpu_custom_call.1} parent=55 // pred_region
          %s550 = sand.u32 %s159, 1
          %s551 = scalar_lea.sflag [#allocation10], %s550
          %s552 = sand.u32 %s159, 1
          %s553 = smul.addr %s552, 8
          %s554 = scalar_lea.vmem [#allocation9], %s553
          %555 = dma.done %s551, 128
        $region64: #{tpu_custom_call.1} parent=55 // pred_fallthru
          _
      $region56: #{tpu_custom_call.1} parent=5 // pred_fallthru
        _
    $region6: #{tpu_custom_call.1} parent=1 // loop_footer
      %s27 = sadd.s32 1, %s23
    $region7: #{tpu_custom_call.1} parent=1 // loop_footer_branch
      %22 = sbr.rel target = $region3
    $region8: #{tpu_custom_call.1} parent=1 // loop_exit
      _
    %556 = vsyncpa [#allocation3], 1
    %s557 = scalar_lea.sflag [#allocation3], 1
    %558 = vsyncpa %s557, 1
    %559 = vsyncpa [#allocation6], 1
    %s560 = scalar_lea.sflag [#allocation6], 1
    %561 = vsyncpa %s560, 1
    %562 = vsyncpa [#allocation4], 1
    %s563 = scalar_lea.sflag [#allocation4], 1
    %564 = vsyncpa %s563, 1
    %565 = vsyncpa [#allocation10], 1
    %s566 = scalar_lea.sflag [#allocation10], 1
    %567 = vsyncpa %s566, 1

</llo_original>
